<compile_context>
chip_gen: v5e
topology: v5e:2x2
jax: 0.10.0
libtpu: 0.0.40
codegen_flags: <defaults>
</compile_context>

<pallas_src>
import jax
import jax.numpy as jnp
from jax.experimental import pallas as pl
from jax.experimental.pallas import tpu as pltpu

WORLD_SIZE = 2          # group=[0, 1]
NUM_ALL_REDUCES = 4     # tags 'test1','test2','test3','test1'
_SCALE = float(WORLD_SIZE ** (NUM_ALL_REDUCES - 1))  # reduces #2..#4 collapse to x8

_LANE = 128             # lane-dense last dim (unmasked vst)
_MAX_TILE_ROWS = 2048   # 2048*128*f32 = 1 MiB per rank per block buffer


def _allreduce_multigroup_kernel(x_ref, o_ref):
    """x_ref, o_ref: (WORLD=2, TILE_R, 128) blocks resident in VMEM.

    Pure VPU path: one row add (accumulated in f32), scale folded in, single
    cast, two lane-dense row stores.  No cross-sublane reduce, no broadcast_to
    temp.
    """
    x0 = x_ref[0].astype(jnp.float32)
    x1 = x_ref[1].astype(jnp.float32)
    s = ((x0 + x1) * jnp.float32(_SCALE)).astype(o_ref.dtype)
    o_ref[0] = s
    o_ref[1] = s


def _round_up(v, m):
    return (v + m - 1) // m * m


def all_reduce_multi_group(x):
    """x: (WORLD, C, H, W) -> (WORLD, C, H, W); out[r] = 8 * (x[0] + x[1])."""
    world = x.shape[0]
    assert world == WORLD_SIZE, "leading axis must be the 2-member group axis"
    n = 1
    for d in x.shape[1:]:
        n *= d

    # Re-layout each rank to sublane/lane-dense (rows, 128) tiles; pad the
    # flattened axis so rows is a multiple of the row-tile (zeros are inert).
    rows_needed = max(pl.cdiv(n, _LANE), 1)
    tile_r = min(_MAX_TILE_ROWS, _round_up(rows_needed, 8))
    rows = _round_up(rows_needed, tile_r)
    n_pad = rows * _LANE

    x2d = x.reshape(world, n)
    if n_pad != n:
        x2d = jnp.pad(x2d, ((0, 0), (0, n_pad - n)))
    x3d = x2d.reshape(world, rows, _LANE)

    itemsize = jnp.dtype(x.dtype).itemsize
    cost = pl.CostEstimate(
        flops=2 * n_pad,                       # add + scale per element
        transcendentals=0,
        bytes_accessed=4 * n_pad * itemsize,   # 2 ranks read + 2 ranks written
    )

    out3d = pl.pallas_call(
        _allreduce_multigroup_kernel,
        out_shape=jax.ShapeDtypeStruct((world, rows, _LANE), x.dtype),
        grid_spec=pltpu.PrefetchScalarGridSpec(
            num_scalar_prefetch=0,
            grid=(rows // tile_r,),
            in_specs=[pl.BlockSpec((world, tile_r, _LANE), lambda i: (0, i, 0))],
            out_specs=pl.BlockSpec((world, tile_r, _LANE), lambda i: (0, i, 0)),
        ),
        compiler_params=pltpu.CompilerParams(
            # independent row tiles -> megacore sharding on v7x
            dimension_semantics=("parallel",),
        ),
        cost_estimate=cost,
    )(x3d)

    out2d = out3d.reshape(world, n_pad)
    if n_pad != n:
        out2d = out2d[:, :n]
    return out2d.reshape(x.shape)


if __name__ == "__main__":
    key = jax.random.PRNGKey(0)
    # per-rank tensor: (C=4, H=16, W=16); stacked over the 2-rank group axis.
    x = jax.random.normal(key, (WORLD_SIZE, 4, 16, 16), dtype=jnp.float32)

    out = jax.block_until_ready(all_reduce_multi_group(x))

    # reference: 8 * (x[0] + x[1]) replicated to both ranks
    ref = jnp.broadcast_to(
        _SCALE * jnp.sum(x, axis=0, keepdims=True), x.shape)
    assert out.shape == x.shape and out.dtype == x.dtype
    assert jnp.allclose(out, ref, rtol=1e-5, atol=1e-5)

    print("KERNEL_OK")
</pallas_src>

<mosaic_0001>
module attributes {stable_mosaic.version = 11 : i64} {
  func.func @_allreduce_multigroup_kernel(%arg0: i32, %arg1: memref<2x8x128xf32, #tpu.memory_space<vmem>>, %arg2: memref<2x8x128xf32, #tpu.memory_space<vmem>>) attributes {dimension_semantics = [#tpu.dimension_semantics<parallel>], iteration_bounds = array<i64: 1>, scalar_prefetch = 0 : i64, scratch_operands = 0 : i64, tpu.core_type = #tpu.core_type<tc>, window_params = [{transform_indices = @transform_0, window_bounds = array<i64: 2, 8, 128>}, {transform_indices = @transform_1, window_bounds = array<i64: 2, 8, 128>}]} {
    %c0 = arith.constant 0 : index
    %c0_0 = arith.constant 0 : index
    %c0_1 = arith.constant 0 : index
    %0 = vector.load %arg1[%c0, %c0_0, %c0_1] : memref<2x8x128xf32, #tpu.memory_space<vmem>>, vector<1x8x128xf32>
    %1 = vector.shape_cast %0 : vector<1x8x128xf32> to vector<8x128xf32>
    %c1 = arith.constant 1 : index
    %c0_2 = arith.constant 0 : index
    %c0_3 = arith.constant 0 : index
    %2 = vector.load %arg1[%c1, %c0_2, %c0_3] : memref<2x8x128xf32, #tpu.memory_space<vmem>>, vector<1x8x128xf32>
    %3 = vector.shape_cast %2 : vector<1x8x128xf32> to vector<8x128xf32>
    %4 = arith.addf %1, %3 : vector<8x128xf32>
    %cst = arith.constant 8.000000e+00 : f32
    %5 = vector.broadcast %cst : f32 to vector<8x128xf32>
    %6 = arith.mulf %4, %5 : vector<8x128xf32>
    %c0_4 = arith.constant 0 : index
    %c0_5 = arith.constant 0 : index
    %c0_6 = arith.constant 0 : index
    %7 = vector.load %arg2[%c0_4, %c0_5, %c0_6] : memref<2x8x128xf32, #tpu.memory_space<vmem>>, vector<1x8x128xf32>
    %8 = vector.shape_cast %7 : vector<1x8x128xf32> to vector<8x128xf32>
    %9 = vector.shape_cast %6 : vector<8x128xf32> to vector<1x8x128xf32>
    tpu.vector_store %arg2[%c0_4, %c0_5, %c0_6], %9 {strides = array<i32>} : memref<2x8x128xf32, #tpu.memory_space<vmem>>, vector<1x8x128xf32>,
    %c1_7 = arith.constant 1 : index
    %c0_8 = arith.constant 0 : index
    %c0_9 = arith.constant 0 : index
    %10 = vector.load %arg2[%c1_7, %c0_8, %c0_9] : memref<2x8x128xf32, #tpu.memory_space<vmem>>, vector<1x8x128xf32>
    %11 = vector.shape_cast %10 : vector<1x8x128xf32> to vector<8x128xf32>
    %12 = vector.shape_cast %6 : vector<8x128xf32> to vector<1x8x128xf32>
    tpu.vector_store %arg2[%c1_7, %c0_8, %c0_9], %12 {strides = array<i32>} : memref<2x8x128xf32, #tpu.memory_space<vmem>>, vector<1x8x128xf32>,
    return
  }
  func.func @transform_0(%arg0: i32) -> (i32, i32, i32) {
    %c0_i32 = arith.constant 0 : i32
    %c0_i32_0 = arith.constant 0 : i32
    %c0_i32_1 = arith.constant 0 : i32
    return %c0_i32, %arg0, %c0_i32_0 : i32, i32, i32
  }
  func.func @transform_1(%arg0: i32) -> (i32, i32, i32) {
    %c0_i32 = arith.constant 0 : i32
    %c0_i32_0 = arith.constant 0 : i32
    %c0_i32_1 = arith.constant 0 : i32
    return %c0_i32, %arg0, %c0_i32_0 : i32, i32, i32
  }
}

</mosaic_0001>

<llo_original>
// kernel: tpu_custom_call.1
$region0: #{tpu_custom_call.1}
  #allocation0 [shape = 'u32[]', space=smem, size = 0x4, offset = 0x4, fixed_abs, tag = 'smem constant byte address 0x4 - core index']
  #allocation1 [shape = 'u32[72,128]{1,0:T(1,128)}', space=vmem, size = 0x9000, scoped, tag = 'internal scratch']
  %s0 = inlined_call_operand.hbm [shape: f32[2,8,128], index: 0, kind: input, shape index: {}]
  %s1 = inlined_call_operand.hbm [shape: f32[2,8,128], index: 1, kind: output, shape index: {}]
  %s2 = sld [smem:[#allocation0]]
  $region18: #{tpu_custom_call.1} parent=0
    _
  %s4 = ssub.s32 1, %s2
  %s5 = scalar_select 0, %s4, %s2
  $region1: #{tpu_custom_call.1} parent=0
    #allocation2 [shape = 'u8[8192]{0}', space=vmem, size = 0x2000, scoped, tag = 'input window, operand 0, single buffered']
    #allocation3 [shape = 's32[1]{0}', space=sflag, size = 0x4, scoped, tag = 'scoped memory for tpu_custom_call.1']
    #allocation4 [shape = 's32[1]{0}', space=sflag, size = 0x4, scoped, tag = 'scoped memory for tpu_custom_call.1']
    #allocation5 [shape = 'u8[8192]{0}', space=vmem, size = 0x2000, scoped, tag = 'output window, operand 0, single buffered']
    %6 = vsyncpa [#allocation3], 0
    %7 = vsyncpa [#allocation4], 0
    // Predicated region
    $region2: #{tpu_custom_call.1} parent=1 // pred_check
      _
    $region3: #{tpu_custom_call.1} parent=1 // pred_check_branch
      %9 = sbr.rel (0) target = $region5
    $region4: #{tpu_custom_call.1} parent=1 // pred_region
      %11 = vsyncadd [#allocation3], 0
      %s12 = sshll.u32 %s0, 4
      %s13 = int_to_ptr.hbm [resolvable:$true] %s12
      %s14 = sshll.u32 [#allocation2], 4
      %s15 = int_to_ptr.vmem [resolvable:$true] %s14
      %20 = dma.hbm_to_vmem [thread:$0]  %s13, 256, %s15, [#allocation3], 128, 128, 8
    $region5: #{tpu_custom_call.1} parent=1 // pred_fallthru
      _
    // Predicated region
    $region6: #{tpu_custom_call.1} parent=1 // pred_check
      _
    $region7: #{tpu_custom_call.1} parent=1 // pred_check_branch
      %22 = sbr.rel (0) target = $region9
    $region8: #{tpu_custom_call.1} parent=1 // pred_region
      %24 = dma.done [#allocation3], 256
    $region9: #{tpu_custom_call.1} parent=1 // pred_fallthru
      _
    %v25 = vld [vmem:[#allocation2] sm:$0xff]
    %s26 = scalar_lea.vmem [#allocation2], 8
    %v27 = vld [vmem:[%s26] sm:$0xff]
    %v28 = vadd.f32 %v25, %v27
    %v29 = vmul.f32 %v28, 8.0
    %30 = vst [vmem:[#allocation5] sm:$0xff] %v29
    %s31 = scalar_lea.vmem [#allocation5], 8
    %32 = vst [vmem:[%s31] sm:$0xff] %v29
    // Predicated region
    $region10: #{tpu_custom_call.1} parent=1 // pred_check
      _
    $region11: #{tpu_custom_call.1} parent=1 // pred_check_branch
      %34 = sbr.rel (0) target = $region13
    $region12: #{tpu_custom_call.1} parent=1 // pred_region
      %36 = vsyncadd [#allocation4], 0
      %s37 = sshll.u32 [#allocation5], 4
      %s38 = int_to_ptr.vmem [resolvable:$true] %s37
      %s39 = sshll.u32 %s1, 4
      %s40 = int_to_ptr.hbm [resolvable:$true] %s39
      %45 = dma.vmem_to_hbm [thread:$0]  %s38, 256, %s40, [#allocation4], 128, 128, 8
    $region13: #{tpu_custom_call.1} parent=1 // pred_fallthru
      _
    // Predicated region
    $region14: #{tpu_custom_call.1} parent=1 // pred_check
      _
    $region15: #{tpu_custom_call.1} parent=1 // pred_check_branch
      %47 = sbr.rel (0) target = $region17
    $region16: #{tpu_custom_call.1} parent=1 // pred_region
      %49 = dma.done [#allocation4], 256
    $region17: #{tpu_custom_call.1} parent=1 // pred_fallthru
      _
    %50 = vsyncpa [#allocation3], 1
    %51 = vsyncpa [#allocation4], 1

</llo_original>
